<compile_context>
chip_gen: v5e
topology: v5e:2x2
jax: 0.10.0
libtpu: 0.0.40
codegen_flags: <defaults>
</compile_context>

<pallas_src>
import jax
import jax.numpy as jnp
from jax.experimental import pallas as pl
from jax.experimental.pallas import tpu as pltpu

_LANE = 128
_SUBLANE = 8


def _vmem_config():
    """Returns (per-step tile budget, vmem_limit_bytes, two_tensorcore_hint)."""
    try:
        cap = pltpu.get_tpu_info().vmem_capacity_bytes
    except Exception:
        cap = 64 * 1024 * 1024  # unknown chip: assume the smallest (v7x-like) part
    if cap >= 96 * 1024 * 1024:
        # v5e / v6e: 128 MiB VMEM, single TensorCore.
        return 96 * 1024 * 1024, 110 * 1024 * 1024, False
    # v7x: 64 MiB VMEM, 2 TensorCores (also the conservative fallback).
    return 32 * 1024 * 1024, 48 * 1024 * 1024, True


def _choose_tile_d(n_rows, n_cols, in_itemsize, comp_itemsize, budget, two_steps):
    """Largest lane-dense TILE_D whose per-step footprint fits `budget`.

    Returns 0 if even a 128-wide column block does not fit (caller falls back
    to the two-pass flash-style path).
    """
    # Per element per grid step: 2x input + 2x output double-buffers plus ~2
    # compute-dtype intermediates (the shifted tile and its exp).
    bytes_per_elem = 4 * in_itemsize + 2 * comp_itemsize
    max_cols = budget // (max(n_rows, 1) * bytes_per_elem)
    tile_d = (max_cols // _LANE) * _LANE
    if tile_d < _LANE:
        return 0
    d_lanes = pl.cdiv(n_cols, _LANE) * _LANE
    tile_d = min(tile_d, d_lanes)
    if two_steps and d_lanes >= 2 * _LANE:
        # v7x megacore: keep >= 2 grid steps so both TensorCores get work.
        half = pl.cdiv(d_lanes // 2, _LANE) * _LANE
        tile_d = min(tile_d, half)
    return int(tile_d)


# --------------------------------------------------------------------------
# Single-pass kernel: whole reduction axis N resident per lane-dense D tile.
# --------------------------------------------------------------------------
def _softmax_kernel(x_ref, o_ref):
    x = x_ref[...]
    # Column-wise max / subtraction in the native dtype (halves vreg/VMEM
    # pressure for bf16 inputs vs. a blanket f32 upcast of the whole tile).
    x_max = jnp.max(x, axis=0, keepdims=True)          # torch.max(x, dim=0, keepdims=True)
    shifted = x - x_max                                 # x - x_max.values
    if jnp.dtype(x_ref.dtype) == jnp.dtype(jnp.bfloat16):
        # bf16 exp (bf16-native EUP on v6e/v7x) + f32 partition accumulation.
        x_exp = jnp.exp(shifted)
        partition = jnp.sum(x_exp, axis=0, dtype=jnp.float32, keepdims=True)
        inv = pl.reciprocal(partition, approx=True).astype(x_exp.dtype)
    else:
        x_exp = jnp.exp(shifted.astype(jnp.float32))    # torch.exp(x - x_max.values)
        partition = jnp.sum(x_exp, axis=0, keepdims=True)
        inv = pl.reciprocal(partition, approx=False)
    # Reciprocal only on the (1, TILE_D) partition row; broadcast multiply
    # rides otherwise-idle VPU slots.
    o_ref[...] = (x_exp * inv).astype(o_ref.dtype)      # x_exp / partition


def _softmax_single_pass(x, tile_d, vmem_limit):
    N, D = x.shape
    item = jnp.dtype(x.dtype).itemsize
    grid = (pl.cdiv(D, tile_d),)
    return pl.pallas_call(
        _softmax_kernel,
        out_shape=jax.ShapeDtypeStruct((N, D), x.dtype),
        grid=grid,
        in_specs=[pl.BlockSpec((N, tile_d), lambda j: (0, j))],
        out_specs=pl.BlockSpec((N, tile_d), lambda j: (0, j)),
        compiler_params=pltpu.CompilerParams(
            dimension_semantics=("parallel",),
            vmem_limit_bytes=vmem_limit,
        ),
        cost_estimate=pl.CostEstimate(
            flops=4 * N * D,
            transcendentals=N * D + D,
            bytes_accessed=2 * N * D * item,
        ),
    )(x)


# --------------------------------------------------------------------------
# Two-pass fallback for N too deep for a resident (N, 128) block:
#   pass 1: running column max + rescaled exp-sum over an "arbitrary" N axis
#   pass 2: elementwise normalize.
# --------------------------------------------------------------------------
def _softmax_two_pass(x, vmem_limit, budget, tile_d=None, tile_n=None):
    N, D = x.shape
    item = jnp.dtype(x.dtype).itemsize
    d_lanes = pl.cdiv(D, _LANE) * _LANE
    if tile_d is None:
        tile_d = min(512, d_lanes)
    # Normalize pass footprint dominates: 2x in + 2x out buffers + ~2 f32 temps.
    bytes_per_elem = 4 * item + 8
    if tile_n is None:
        tile_n = (budget // (tile_d * bytes_per_elem)) // _SUBLANE * _SUBLANE
    tile_n = int(max(_SUBLANE, min(tile_n, pl.cdiv(N, _SUBLANE) * _SUBLANE)))
    nd = pl.cdiv(D, tile_d)
    nn = pl.cdiv(N, tile_n)

    def stats_kernel(x_ref, m_ref, s_ref):
        k = pl.program_id(1)

        @pl.when(k == 0)
        def _():
            m_ref[...] = jnp.full(m_ref.shape, -jnp.inf, m_ref.dtype)
            s_ref[...] = jnp.zeros_like(s_ref)

        xt = x_ref[...].astype(jnp.float32)
        # Mask rows past N: the last N tile may read out-of-bounds garbage.
        row = jax.lax.broadcasted_iota(jnp.int32, xt.shape, 0) + k * tile_n
        xt = jnp.where(row < N, xt, -jnp.inf)
        m_prev = m_ref[...]
        m_new = jnp.maximum(m_prev, jnp.max(xt, axis=0, keepdims=True))
        s_ref[...] = (s_ref[...] * jnp.exp(m_prev - m_new)
                      + jnp.sum(jnp.exp(xt - m_new), axis=0, keepdims=True))
        m_ref[...] = m_new

    m, s = pl.pallas_call(
        stats_kernel,
        out_shape=(jax.ShapeDtypeStruct((1, D), jnp.float32),
                   jax.ShapeDtypeStruct((1, D), jnp.float32)),
        grid=(nd, nn),
        in_specs=[pl.BlockSpec((tile_n, tile_d), lambda j, k: (k, j))],
        out_specs=[pl.BlockSpec((1, tile_d), lambda j, k: (0, j)),
                   pl.BlockSpec((1, tile_d), lambda j, k: (0, j))],
        compiler_params=pltpu.CompilerParams(
            dimension_semantics=("parallel", "arbitrary"),
            vmem_limit_bytes=vmem_limit,
        ),
        cost_estimate=pl.CostEstimate(
            flops=5 * N * D,
            transcendentals=N * D,
            bytes_accessed=N * D * item + 8 * D,
        ),
    )(x)

    approx = bool(jnp.dtype(x.dtype) == jnp.dtype(jnp.bfloat16))

    def normalize_kernel(x_ref, m_ref, s_ref, o_ref):
        xt = x_ref[...].astype(jnp.float32)
        e = jnp.exp(xt - m_ref[...])
        o_ref[...] = (e * pl.reciprocal(s_ref[...], approx=approx)).astype(o_ref.dtype)

    return pl.pallas_call(
        normalize_kernel,
        out_shape=jax.ShapeDtypeStruct((N, D), x.dtype),
        grid=(nn, nd),
        in_specs=[pl.BlockSpec((tile_n, tile_d), lambda i, j: (i, j)),
                  pl.BlockSpec((1, tile_d), lambda i, j: (0, j)),
                  pl.BlockSpec((1, tile_d), lambda i, j: (0, j))],
        out_specs=pl.BlockSpec((tile_n, tile_d), lambda i, j: (i, j)),
        compiler_params=pltpu.CompilerParams(
            dimension_semantics=("parallel", "parallel"),
            vmem_limit_bytes=vmem_limit,
        ),
        cost_estimate=pl.CostEstimate(
            flops=3 * N * D,
            transcendentals=N * D + D,
            bytes_accessed=2 * N * D * item + 8 * D,
        ),
    )(x, m, s)


# --------------------------------------------------------------------------
# Dispatch + public wrapper.
# --------------------------------------------------------------------------
def _softmax_stable_2d(x, tile_d=None, force_two_pass=False, tile_n=None):
    N, D = x.shape
    budget, vmem_limit, two_tc = _vmem_config()
    in_item = jnp.dtype(x.dtype).itemsize
    comp_item = 2 if jnp.dtype(x.dtype) == jnp.dtype(jnp.bfloat16) else 4
    auto_tile_d = _choose_tile_d(N, D, in_item, comp_item, budget, two_tc)
    if force_two_pass or auto_tile_d == 0:
        # Reduction dim too deep for a resident (N, 128) column block:
        # flash-style two-pass fallback instead of a compile-time VMEM OOM.
        return _softmax_two_pass(x, vmem_limit, budget, tile_d=tile_d, tile_n=tile_n)
    return _softmax_single_pass(x, tile_d if tile_d is not None else auto_tile_d,
                                vmem_limit)


def softmax_stable(x, *, tile_d=None, force_two_pass=False, tile_n=None):
    """Stable softmax along axis 0 (PyTorch SoftmaxStable.forward semantics)."""
    orig_shape = x.shape
    x2 = x if x.ndim == 2 else x.reshape(orig_shape[0], -1)
    out = _softmax_stable_2d(x2, tile_d=tile_d, force_two_pass=force_two_pass,
                             tile_n=tile_n)
    return out.reshape(orig_shape)


def _reference(x):
    x_max = jnp.max(x, axis=0, keepdims=True)
    x_exp = jnp.exp(x - x_max)
    return x_exp / jnp.sum(x_exp, axis=0, keepdims=True)


if __name__ == "__main__":
    key = jax.random.PRNGKey(0)

    # Main small case matching the module's intended use: (seq=8, hidden=32) f32.
    x = jax.random.normal(key, (8, 32), dtype=jnp.float32)
    out = jax.block_until_ready(softmax_stable(x))
    assert out.shape == x.shape and out.dtype == x.dtype
    assert jnp.allclose(out, _reference(x), atol=1e-6, rtol=1e-6)

    # Multi-tile pipelined case: force TILE_D=128 -> 3 grid steps on the D axis.
    x2 = jax.random.normal(jax.random.PRNGKey(1), (64, 384), dtype=jnp.float32)
    out2 = jax.block_until_ready(softmax_stable(x2, tile_d=128))
    assert jnp.allclose(out2, _reference(x2), atol=1e-6, rtol=1e-6)

    # 1D vector case (the original exercise): softmax over dim 0.
    x3 = jnp.array([1.0, 2.0, 3.0], dtype=jnp.float32)
    out3 = jax.block_until_ready(softmax_stable(x3))
    assert out3.shape == x3.shape
    assert jnp.allclose(out3, _reference(x3), atol=1e-6, rtol=1e-6)

    # bf16 case: exercises the bf16-exp / f32-sum / approx-reciprocal branch.
    x4 = jax.random.normal(jax.random.PRNGKey(2), (32, 256), dtype=jnp.bfloat16)
    out4 = jax.block_until_ready(softmax_stable(x4))
    ref4 = _reference(x4.astype(jnp.float32))
    assert out4.dtype == jnp.bfloat16
    assert jnp.allclose(out4.astype(jnp.float32), ref4, atol=3e-2, rtol=3e-2)

    # Huge-N fallback, forced at a small shape (N=60 also exercises row masking
    # and the pl.when init / running-rescale logic of the stats pass).
    x5 = jax.random.normal(jax.random.PRNGKey(3), (60, 384), dtype=jnp.float32)
    out5 = jax.block_until_ready(
        softmax_stable(x5, force_two_pass=True, tile_d=128, tile_n=16))
    assert jnp.allclose(out5, _reference(x5), atol=1e-5, rtol=1e-5)

    print("KERNEL_OK")
</pallas_src>

<mosaic_0001>
module attributes {stable_mosaic.version = 11 : i64} {
  func.func @_softmax_kernel(%arg0: i32, %arg1: memref<8x128xf32, #tpu.memory_space<vmem>>, %arg2: memref<8x128xf32, #tpu.memory_space<vmem>>) attributes {dimension_semantics = [#tpu.dimension_semantics<parallel>], iteration_bounds = array<i64: 1>, scalar_prefetch = 0 : i64, scratch_operands = 0 : i64, tpu.core_type = #tpu.core_type<tc>, window_params = [{transform_indices = @transform_0, window_bounds = array<i64: 8, 128>}, {transform_indices = @transform_1, window_bounds = array<i64: 8, 128>}]} {
    %c0 = arith.constant 0 : index
    %c0_0 = arith.constant 0 : index
    %0 = vector.load %arg1[%c0, %c0_0] : memref<8x128xf32, #tpu.memory_space<vmem>>, vector<8x128xf32>
    %cst = arith.constant dense<0xFF800000> : vector<128xf32>
    %1 = vector.multi_reduction <maximumf>, %0, %cst [0] : vector<8x128xf32> to vector<128xf32>
    %2 = vector.shape_cast %1 : vector<128xf32> to vector<1x128xf32>
    %3 = vector.broadcast %2 : vector<1x128xf32> to vector<8x128xf32>
    %4 = arith.subf %0, %3 : vector<8x128xf32>
    %5 = math.exp %4 : vector<8x128xf32>
    %cst_1 = arith.constant dense<0.000000e+00> : vector<128xf32>
    %6 = vector.multi_reduction <add>, %5, %cst_1 [0] : vector<8x128xf32> to vector<128xf32>
    %7 = vector.shape_cast %6 : vector<128xf32> to vector<1x128xf32>
    %8 = tpu.reciprocal %7 : vector<1x128xf32> -> vector<1x128xf32>
    %9 = vector.broadcast %8 : vector<1x128xf32> to vector<8x128xf32>
    %10 = arith.mulf %5, %9 : vector<8x128xf32>
    %c0_2 = arith.constant 0 : index
    %c0_3 = arith.constant 0 : index
    %11 = vector.load %arg2[%c0_2, %c0_3] : memref<8x128xf32, #tpu.memory_space<vmem>>, vector<8x128xf32>
    tpu.vector_store %arg2[%c0_2, %c0_3], %10 {strides = array<i32>} : memref<8x128xf32, #tpu.memory_space<vmem>>, vector<8x128xf32>,
    return
  }
  func.func @transform_0(%arg0: i32) -> (i32, i32) {
    %c0_i32 = arith.constant 0 : i32
    %c0_i32_0 = arith.constant 0 : i32
    return %c0_i32, %arg0 : i32, i32
  }
  func.func @transform_1(%arg0: i32) -> (i32, i32) {
    %c0_i32 = arith.constant 0 : i32
    %c0_i32_0 = arith.constant 0 : i32
    return %c0_i32, %arg0 : i32, i32
  }
}

</mosaic_0001>

<llo_original>
// kernel: tpu_custom_call.1
$region0: #{tpu_custom_call.1}
  #allocation0 [shape = 'u32[]', space=smem, size = 0x4, offset = 0x4, fixed_abs, tag = 'smem constant byte address 0x4 - core index']
  #allocation1 [shape = 'u32[72,128]{1,0:T(1,128)}', space=vmem, size = 0x9000, scoped, tag = 'internal scratch']
  %s0 = inlined_call_operand.hbm [shape: f32[8,32], index: 0, kind: input, shape index: {}]
  %s1 = inlined_call_operand.hbm [shape: f32[8,32], index: 1, kind: output, shape index: {}]
  %s2 = sld [smem:[#allocation0]]
  $region18: #{tpu_custom_call.1} parent=0
    _
  %s4 = ssub.s32 1, %s2
  %s5 = scalar_select 0, %s4, %s2
  $region1: #{tpu_custom_call.1} parent=0
    #allocation2 [shape = 'u8[4096]{0}', space=vmem, size = 0x1000, scoped, tag = 'input window, operand 0, single buffered']
    #allocation3 [shape = 's32[1]{0}', space=sflag, size = 0x4, scoped, tag = 'scoped memory for tpu_custom_call.1']
    #allocation4 [shape = 's32[1]{0}', space=sflag, size = 0x4, scoped, tag = 'scoped memory for tpu_custom_call.1']
    #allocation5 [shape = 'u8[4096]{0}', space=vmem, size = 0x1000, scoped, tag = 'output window, operand 0, single buffered']
    %6 = vsyncpa [#allocation3], 0
    %7 = vsyncpa [#allocation4], 0
    // Predicated region
    $region2: #{tpu_custom_call.1} parent=1 // pred_check
      _
    $region3: #{tpu_custom_call.1} parent=1 // pred_check_branch
      %9 = sbr.rel (0) target = $region5
    $region4: #{tpu_custom_call.1} parent=1 // pred_region
      %11 = vsyncadd [#allocation3], 0
      %s13 = sshll.u32 %s0, 4
      %s14 = int_to_ptr.hbm [resolvable:$true] %s13
      %s15 = sshll.u32 [#allocation2], 4
      %s16 = int_to_ptr.vmem [resolvable:$true] %s15
      %18 = dma.hbm_to_vmem [thread:$0]  %s14, 128, %s16, [#allocation3]
    $region5: #{tpu_custom_call.1} parent=1 // pred_fallthru
      _
    // Predicated region
    $region6: #{tpu_custom_call.1} parent=1 // pred_check
      _
    $region7: #{tpu_custom_call.1} parent=1 // pred_check_branch
      %20 = sbr.rel (0) target = $region9
    $region8: #{tpu_custom_call.1} parent=1 // pred_region
      %22 = dma.done [#allocation3], 128
    $region9: #{tpu_custom_call.1} parent=1 // pred_fallthru
      _
    %v23 = vld [vmem:[#allocation2] sm:$0xff]
    %v24 = vrot.slane %v23, 4
    %v25 = vmax.f32 %v23, %v24
    %v26 = vrot.slane %v25, 2
    %v27 = vmax.f32 %v25, %v26
    %v28 = vrot.slane %v27, 1
    %v29 = vmax.f32 %v27, %v28
    %v30 = vsub.f32 %v23, %v29
    %v31 = vmul.f32 %v30, 1.442695
    %v32 = vpow.pop %v31
    %v33 = vrot.slane %v32, 4
    %v34 = vadd.f32 %v32, %v33
    %v35 = vrot.slane %v34, 2
    %v36 = vadd.f32 %v34, %v35
    %v37 = vrot.slane %v36, 1
    %v38 = vadd.f32 %v36, %v37
    %v39 = vrcp.pop %v38
    %v40 = vmul.f32 %v38, %v39
    %v41 = vsub.f32 1.0, %v40
    %v42 = vmul.f32 %v39, %v41
    %v43 = vadd.f32 %v39, %v42
    %vm44 = vweird.f32 %v38
    %vm45 = vweird.f32 %v39
    %vm46 = vmor %vm44, %vm45
    %v47 = vsel %vm46, %v39, %v43
    %v48 = vand.u32 2147483647, %v38
    %vm49 = vcmp.eq.f32.partialorder %v48, 8.507059e+37
    %v50 = vand.u32 %v38, 2147483648
    %v51 = vor.u32 1.1754944e-38, %v50
    %v52 = vsel %vm49, %v51, %v47
    %v53 = vmul.f32 %v32, %v52
    %54 = vst [vmem:[#allocation5] sm:$0xff] %v53
    // Predicated region
    $region10: #{tpu_custom_call.1} parent=1 // pred_check
      _
    $region11: #{tpu_custom_call.1} parent=1 // pred_check_branch
      %56 = sbr.rel (0) target = $region13
    $region12: #{tpu_custom_call.1} parent=1 // pred_region
      %58 = vsyncadd [#allocation4], 0
      %s60 = sshll.u32 [#allocation5], 4
      %s61 = int_to_ptr.vmem [resolvable:$true] %s60
      %s62 = sshll.u32 %s1, 4
      %s63 = int_to_ptr.hbm [resolvable:$true] %s62
      %65 = dma.vmem_to_hbm [thread:$0]  %s61, 128, %s63, [#allocation4]
    $region13: #{tpu_custom_call.1} parent=1 // pred_fallthru
      _
    // Predicated region
    $region14: #{tpu_custom_call.1} parent=1 // pred_check
      _
    $region15: #{tpu_custom_call.1} parent=1 // pred_check_branch
      %67 = sbr.rel (0) target = $region17
    $region16: #{tpu_custom_call.1} parent=1 // pred_region
      %69 = dma.done [#allocation4], 128
    $region17: #{tpu_custom_call.1} parent=1 // pred_fallthru
      _
    %70 = vsyncpa [#allocation3], 1
    %71 = vsyncpa [#allocation4], 1

</llo_original>
